<compile_context>
chip_gen: v6e
topology: v6e:2x2x1
jax: 0.10.0
libtpu: 0.0.40
codegen_flags: <defaults>
</compile_context>

<pallas_src>
import functools

import jax
import jax.numpy as jnp
from jax.experimental import pallas as pl
from jax.experimental.pallas import tpu as pltpu


# ------------------------------------------------------------------ kernels --

def _make_fused_gnn_kernel(layer_cfg):
    """Single kernel for the whole forward pass.

    layer_cfg: tuple of (c_out: int, apply_relu: bool) per layer (static).
    Ref order: x, adj, [w_cat_l, b_l] * L, w_proj, b_proj, out.
    (LayerNorm gamma/beta are pre-folded into w_proj / b_proj.)
    """
    n_layers = len(layer_cfg)

    def kernel(x_ref, adj_ref, *rest):
        layer_refs = rest[:2 * n_layers]
        w_proj_ref, b_proj_ref, out_ref = rest[2 * n_layers:]

        x = x_ref[...]                        # (N, C_in) f32
        adj = adj_ref[...]                    # (N, N) f32; adj[i, j] = #edges j -> i
        mask = adj > 0.0                      # hoisted: reused by every layer
        neg = jnp.float32(-1e30)

        for li, (c_out, apply_relu) in enumerate(layer_cfg):
            w_cat = layer_refs[2 * li][...]       # (C_in_l, 2*C_out + 2) bf16
            b = layer_refs[2 * li + 1][...]       # (1, C_out) f32 (= b_conv + b_lin)

            # One wide MXU pass (bf16 operands, f32 accumulation):
            # columns = [h_src | a_src | a_dst | lin_out]  (h_src at lane 0)
            y = jnp.dot(x.astype(jnp.bfloat16), w_cat,
                        preferred_element_type=jnp.float32)
            h_src = y[:, :c_out]                          # (N, C_out)
            a_src = y[:, c_out:c_out + 1]                 # (N, 1)
            a_dst = y[:, c_out + 1:c_out + 2]             # (N, 1)
            lin = y[:, c_out + 2:]                        # (N, C_out)

            # e[i, j] = leaky_relu(a_dst[i] + a_src[j], 0.2)
            e = a_dst + jnp.transpose(a_src)              # (N, N)
            e = jnp.where(e > 0, e, 0.2 * e)

            # Masked online-softmax numerator over incoming edges j of node i;
            # duplicate edges contribute via adj multiplicities (matches PyG
            # edge-list softmax).  The mask/where is kept (not dropped) so
            # non-edge logits can never steal the row max and underflow edges.
            e = jnp.where(mask, e, neg)
            m = jnp.max(e, axis=-1, keepdims=True)
            p = jnp.exp(e - m) * adj                      # (N, N) un-normalized
            denom = jnp.sum(p, axis=-1, keepdims=True)    # (N, 1)

            # Deferred normalization: aggregate first (bf16 MXU, f32 acc),
            # then scale the small (N, C_out) result by 1/denom (EUP).
            agg = jnp.dot(p.astype(jnp.bfloat16), h_src.astype(jnp.bfloat16),
                          preferred_element_type=jnp.float32)
            inv = pl.reciprocal(jnp.maximum(denom, jnp.float32(1e-30)),
                                approx=True)
            out = agg * inv + lin + b
            if apply_relu:
                out = jnp.maximum(out, 0.0)
            x = out

        # PyG graph-mode LayerNorm with batch=None:
        #   x = x - x.mean(); out = x / (x.std(unbiased=False) + eps)  (eps OUTSIDE sqrt)
        # One-pass statistics (sum / sum-of-squares), gamma/beta folded into proj.
        inv_count = jnp.float32(1.0 / float(x.shape[0] * x.shape[1]))
        s1 = jnp.sum(x)
        s2 = jnp.sum(x * x)
        mean = s1 * inv_count
        var = jnp.maximum(s2 * inv_count - mean * mean, 0.0)
        xn = (x - mean) / (jnp.sqrt(var) + jnp.float32(1e-5))

        out_ref[...] = jnp.dot(xn, w_proj_ref[...],
                               preferred_element_type=jnp.float32) + b_proj_ref[...]

    return kernel


# ----------------------------------------------------------------- wrappers --

_VMEM_SPEC = pl.BlockSpec(memory_space=pltpu.MemorySpace.VMEM)


def fuse_params(params):
    """Pre-fuse per-layer weights (trace-time constant folding of weights only).

    Returns (fused_pytree, static_cfg) where static_cfg is hashable (jit static).
    """
    n_layers = len(params["layers"])
    assert n_layers > 0
    layers = []
    cfg = []
    for i, lp in enumerate(params["layers"]):
        c_out = int(lp["w_src"].shape[1])
        a_src_col = jnp.dot(lp["w_src"], lp["att_src"])   # (C_in, 1)
        a_dst_col = jnp.dot(lp["w_dst"], lp["att_dst"])   # (C_in, 1)
        # Re-packed layout [W_src | a_src | a_dst | W_lin]: keeps h_src (the
        # second-matmul operand) at lane 0; total width 2*C_out+2 stays within
        # one 128-column MXU group (v5e) — no per-segment padding.
        w_cat = jnp.concatenate(
            [lp["w_src"], a_src_col, a_dst_col, lp["w_lin"]], axis=1)
        w_cat = w_cat.astype(jnp.bfloat16)                # bf16 MXU operand
        b = lp["b_conv"] + lp["b_lin"]                    # (1, C_out) f32
        layers.append(dict(w_cat=w_cat, b=b))
        cfg.append((c_out, i != n_layers - 1))

    # Fold the per-feature LayerNorm affine into the projection:
    #   (xn * gamma + beta) @ W + b  ==  xn @ (gamma.T * W) + (beta @ W + b)
    w_proj = params["ln_gamma"].T * params["w_proj"]                       # (C, 1)
    b_proj = params["b_proj"] + jnp.dot(params["ln_beta"], params["w_proj"])  # (1, 1)

    fused = dict(layers=layers, w_proj=w_proj, b_proj=b_proj)
    return fused, tuple(cfg)


@functools.partial(jax.jit, static_argnums=(3,))
def gnn_forward(x, adj, fused, cfg):
    n = x.shape[0]
    inputs = [x, adj]
    for lp in fused["layers"]:
        inputs += [lp["w_cat"], lp["b"]]
    inputs += [fused["w_proj"], fused["b_proj"]]

    # Explicit VMEM budget: resident inputs + a few f32 (N, N) intermediates
    # per layer (e, p, mask), with headroom; capped at 48 MiB so it stays well
    # inside v7x's 64 MiB physical VMEM (v5e/v6e have 128 MiB).
    in_bytes = sum(int(a.size) * a.dtype.itemsize for a in inputs)
    inter_bytes = 4 * n * n * 4
    vmem_limit = min(max(int(1.5 * (in_bytes + inter_bytes)), 32 * 1024 * 1024),
                     48 * 1024 * 1024)

    return pl.pallas_call(
        _make_fused_gnn_kernel(cfg),
        out_shape=jax.ShapeDtypeStruct((n, 1), jnp.float32),
        in_specs=[_VMEM_SPEC] * len(inputs),
        out_specs=_VMEM_SPEC,
        compiler_params=pltpu.CompilerParams(vmem_limit_bytes=vmem_limit),
    )(*inputs)


# --------------------------------------------------------------------- glue --

def edges_to_adjacency(edge_index, num_nodes):
    """edge_index: (2, E) int32 with row 0 = source, row 1 = target.

    adj[i, j] = number of edges j -> i (counts, so duplicate edges reproduce
    PyG's edge-list softmax semantics).
    """
    src, dst = edge_index[0], edge_index[1]
    adj = jnp.zeros((num_nodes, num_nodes), jnp.float32)
    return adj.at[dst, src].add(1.0)


def init_params(key, in_features, channel_counts):
    """Deterministic synthetic parameters matching the module's shapes."""
    layers = []
    c_prev = in_features
    for i, c_out in enumerate(channel_counts):
        key, k1, k2, k3, k4, k5 = jax.random.split(key, 6)
        scale_src = 1.0 / jnp.sqrt(jnp.float32(c_prev))
        w_src = scale_src * jax.random.normal(k1, (c_prev, c_out), jnp.float32)
        if i == 0:
            # in_channels = (-1, -1): separate source / destination transforms
            w_dst = scale_src * jax.random.normal(k2, (c_prev, c_out), jnp.float32)
        else:
            # int in_channels: GATConv shares the same linear for src and dst
            w_dst = w_src
        scale_att = 1.0 / jnp.sqrt(jnp.float32(c_out))
        layers.append(dict(
            w_src=w_src,
            w_dst=w_dst,
            att_src=scale_att * jax.random.normal(k3, (c_out, 1), jnp.float32),
            att_dst=scale_att * jax.random.normal(k4, (c_out, 1), jnp.float32),
            b_conv=jnp.zeros((1, c_out), jnp.float32),
            w_lin=scale_src * jax.random.normal(k5, (c_prev, c_out), jnp.float32),
            b_lin=jnp.zeros((1, c_out), jnp.float32),
        ))
        c_prev = c_out

    key, kp = jax.random.split(key)
    params = dict(
        layers=layers,
        ln_gamma=jnp.ones((1, c_prev), jnp.float32),
        ln_beta=jnp.zeros((1, c_prev), jnp.float32),
        w_proj=(1.0 / jnp.sqrt(jnp.float32(c_prev)))
               * jax.random.normal(kp, (c_prev, 1), jnp.float32),
        b_proj=jnp.zeros((1, 1), jnp.float32),
    )
    return params


# --------------------------------------------------------------------- main --

if __name__ == "__main__":
    key = jax.random.PRNGKey(0)

    num_nodes = 16
    in_features = 8
    channel_counts = [32, 32]
    num_extra_edges = 24

    # Node features
    key, kx, ke = jax.random.split(key, 3)
    x = jax.random.normal(kx, (num_nodes, in_features), jnp.float32)

    # Edge index: ring (so every node has at least one incoming edge) + random extras
    ring_src = jnp.arange(num_nodes, dtype=jnp.int32)
    ring_dst = (ring_src + 1) % num_nodes
    extra = jax.random.randint(ke, (2, num_extra_edges), 0, num_nodes, jnp.int32)
    edge_index = jnp.concatenate(
        [jnp.stack([ring_src, ring_dst]), extra], axis=1)     # (2, E)

    adj = edges_to_adjacency(edge_index, num_nodes)
    params = init_params(key, in_features, channel_counts)
    fused, cfg = fuse_params(params)

    out = gnn_forward(x, adj, fused, cfg)
    out = jax.block_until_ready(out)

    assert out.shape == (num_nodes, 1), out.shape
    assert bool(jnp.all(jnp.isfinite(out)))
    print("KERNEL_OK")
</pallas_src>

<mosaic_0001>
module attributes {stable_mosaic.version = 11 : i64} {
  func.func @kernel(%arg0: memref<16x8xf32, #tpu.memory_space<vmem>>, %arg1: memref<16x16xf32, #tpu.memory_space<vmem>>, %arg2: memref<8x66xbf16, #tpu.memory_space<vmem>>, %arg3: memref<1x32xf32, #tpu.memory_space<vmem>>, %arg4: memref<32x66xbf16, #tpu.memory_space<vmem>>, %arg5: memref<1x32xf32, #tpu.memory_space<vmem>>, %arg6: memref<32x1xf32, #tpu.memory_space<vmem>>, %arg7: memref<1x1xf32, #tpu.memory_space<vmem>>, %arg8: memref<16x1xf32, #tpu.memory_space<vmem>>) attributes {dimension_semantics = [], scalar_prefetch = 0 : i64, scratch_operands = 0 : i64, tpu.core_type = #tpu.core_type<tc>} {
    %c0 = arith.constant 0 : index
    %c0_0 = arith.constant 0 : index
    %0 = vector.load %arg0[%c0, %c0_0] : memref<16x8xf32, #tpu.memory_space<vmem>>, vector<16x8xf32>
    %c0_1 = arith.constant 0 : index
    %c0_2 = arith.constant 0 : index
    %1 = vector.load %arg1[%c0_1, %c0_2] : memref<16x16xf32, #tpu.memory_space<vmem>>, vector<16x16xf32>
    %cst = arith.constant 0.000000e+00 : f32
    %2 = vector.broadcast %cst : f32 to vector<16x16xf32>
    %3 = arith.cmpf ogt, %1, %2 : vector<16x16xf32>
    %c0_3 = arith.constant 0 : index
    %c0_4 = arith.constant 0 : index
    %4 = vector.load %arg2[%c0_3, %c0_4] : memref<8x66xbf16, #tpu.memory_space<vmem>>, vector<8x66xbf16>
    %c0_5 = arith.constant 0 : index
    %c0_6 = arith.constant 0 : index
    %5 = vector.load %arg3[%c0_5, %c0_6] : memref<1x32xf32, #tpu.memory_space<vmem>>, vector<1x32xf32>
    %6 = arith.truncf %0 : vector<16x8xf32> to vector<16x8xbf16>
    %cst_7 = arith.constant dense<0.000000e+00> : vector<16x66xf32>
    %7 = tpu.matmul %6, %4, %cst_7 {dimension_numbers = #tpu.dot_dimension_numbers<[1], [0], [0], [1], [0, 0, 1, 1], [], []>} : vector<16x8xbf16>, vector<8x66xbf16>, vector<16x66xf32> -> vector<16x66xf32>
    %8 = vector.extract_strided_slice %7 {offsets = [0, 0], sizes = [16, 32], strides = [1, 1]} : vector<16x66xf32> to vector<16x32xf32>
    %9 = vector.extract_strided_slice %7 {offsets = [0, 32], sizes = [16, 1], strides = [1, 1]} : vector<16x66xf32> to vector<16x1xf32>
    %10 = vector.extract_strided_slice %7 {offsets = [0, 33], sizes = [16, 1], strides = [1, 1]} : vector<16x66xf32> to vector<16x1xf32>
    %11 = vector.extract_strided_slice %7 {offsets = [0, 34], sizes = [16, 32], strides = [1, 1]} : vector<16x66xf32> to vector<16x32xf32>
    %12 = tpu.transpose %9, [1, 0] : vector<16x1xf32> -> vector<1x16xf32>
    %13 = vector.broadcast %10 : vector<16x1xf32> to vector<16x16xf32>
    %14 = vector.broadcast %12 : vector<1x16xf32> to vector<16x16xf32>
    %15 = arith.addf %13, %14 : vector<16x16xf32>
    %cst_8 = arith.constant 0.000000e+00 : f32
    %16 = vector.broadcast %cst_8 : f32 to vector<16x16xf32>
    %17 = arith.cmpf ogt, %15, %16 : vector<16x16xf32>
    %cst_9 = arith.constant 2.000000e-01 : f32
    %18 = vector.broadcast %cst_9 : f32 to vector<16x16xf32>
    %19 = arith.mulf %18, %15 : vector<16x16xf32>
    %20 = arith.select %17, %15, %19 : vector<16x16xi1>, vector<16x16xf32>
    %cst_10 = arith.constant -1.000000e+30 : f32
    %21 = vector.broadcast %cst_10 : f32 to vector<16x16xf32>
    %22 = arith.select %3, %20, %21 : vector<16x16xi1>, vector<16x16xf32>
    %cst_11 = arith.constant dense<0xFF800000> : vector<16xf32>
    %23 = vector.multi_reduction <maximumf>, %22, %cst_11 [1] : vector<16x16xf32> to vector<16xf32>
    %24 = vector.shape_cast %23 : vector<16xf32> to vector<16x1xf32>
    %25 = vector.broadcast %24 : vector<16x1xf32> to vector<16x16xf32>
    %26 = arith.subf %22, %25 : vector<16x16xf32>
    %27 = math.exp %26 : vector<16x16xf32>
    %28 = arith.mulf %27, %1 : vector<16x16xf32>
    %cst_12 = arith.constant dense<0.000000e+00> : vector<16xf32>
    %29 = vector.multi_reduction <add>, %28, %cst_12 [1] : vector<16x16xf32> to vector<16xf32>
    %30 = vector.shape_cast %29 : vector<16xf32> to vector<16x1xf32>
    %31 = arith.truncf %28 : vector<16x16xf32> to vector<16x16xbf16>
    %32 = arith.truncf %8 : vector<16x32xf32> to vector<16x32xbf16>
    %cst_13 = arith.constant dense<0.000000e+00> : vector<16x32xf32>
    %33 = tpu.matmul %31, %32, %cst_13 {dimension_numbers = #tpu.dot_dimension_numbers<[1], [0], [0], [1], [0, 0, 1, 1], [], []>} : vector<16x16xbf16>, vector<16x32xbf16>, vector<16x32xf32> -> vector<16x32xf32>
    %cst_14 = arith.constant 1.000000e-30 : f32
    %34 = vector.broadcast %cst_14 : f32 to vector<16x1xf32>
    %35 = arith.maximumf %30, %34 : vector<16x1xf32>
    %36 = tpu.reciprocal %35 {approx = true} : vector<16x1xf32> -> vector<16x1xf32>
    %37 = vector.broadcast %36 : vector<16x1xf32> to vector<16x32xf32>
    %38 = arith.mulf %33, %37 : vector<16x32xf32>
    %39 = arith.addf %38, %11 : vector<16x32xf32>
    %40 = vector.broadcast %5 : vector<1x32xf32> to vector<16x32xf32>
    %41 = arith.addf %39, %40 : vector<16x32xf32>
    %cst_15 = arith.constant 0.000000e+00 : f32
    %42 = vector.broadcast %cst_15 : f32 to vector<16x32xf32>
    %43 = arith.maximumf %41, %42 : vector<16x32xf32>
    %c0_16 = arith.constant 0 : index
    %c0_17 = arith.constant 0 : index
    %44 = vector.load %arg4[%c0_16, %c0_17] : memref<32x66xbf16, #tpu.memory_space<vmem>>, vector<32x66xbf16>
    %c0_18 = arith.constant 0 : index
    %c0_19 = arith.constant 0 : index
    %45 = vector.load %arg5[%c0_18, %c0_19] : memref<1x32xf32, #tpu.memory_space<vmem>>, vector<1x32xf32>
    %46 = arith.truncf %43 : vector<16x32xf32> to vector<16x32xbf16>
    %cst_20 = arith.constant dense<0.000000e+00> : vector<16x66xf32>
    %47 = tpu.matmul %46, %44, %cst_20 {dimension_numbers = #tpu.dot_dimension_numbers<[1], [0], [0], [1], [0, 0, 1, 1], [], []>} : vector<16x32xbf16>, vector<32x66xbf16>, vector<16x66xf32> -> vector<16x66xf32>
    %48 = vector.extract_strided_slice %47 {offsets = [0, 0], sizes = [16, 32], strides = [1, 1]} : vector<16x66xf32> to vector<16x32xf32>
    %49 = vector.extract_strided_slice %47 {offsets = [0, 32], sizes = [16, 1], strides = [1, 1]} : vector<16x66xf32> to vector<16x1xf32>
    %50 = vector.extract_strided_slice %47 {offsets = [0, 33], sizes = [16, 1], strides = [1, 1]} : vector<16x66xf32> to vector<16x1xf32>
    %51 = vector.extract_strided_slice %47 {offsets = [0, 34], sizes = [16, 32], strides = [1, 1]} : vector<16x66xf32> to vector<16x32xf32>
    %52 = tpu.transpose %49, [1, 0] : vector<16x1xf32> -> vector<1x16xf32>
    %53 = vector.broadcast %50 : vector<16x1xf32> to vector<16x16xf32>
    %54 = vector.broadcast %52 : vector<1x16xf32> to vector<16x16xf32>
    %55 = arith.addf %53, %54 : vector<16x16xf32>
    %cst_21 = arith.constant 0.000000e+00 : f32
    %56 = vector.broadcast %cst_21 : f32 to vector<16x16xf32>
    %57 = arith.cmpf ogt, %55, %56 : vector<16x16xf32>
    %cst_22 = arith.constant 2.000000e-01 : f32
    %58 = vector.broadcast %cst_22 : f32 to vector<16x16xf32>
    %59 = arith.mulf %58, %55 : vector<16x16xf32>
    %60 = arith.select %57, %55, %59 : vector<16x16xi1>, vector<16x16xf32>
    %cst_23 = arith.constant -1.000000e+30 : f32
    %61 = vector.broadcast %cst_23 : f32 to vector<16x16xf32>
    %62 = arith.select %3, %60, %61 : vector<16x16xi1>, vector<16x16xf32>
    %cst_24 = arith.constant dense<0xFF800000> : vector<16xf32>
    %63 = vector.multi_reduction <maximumf>, %62, %cst_24 [1] : vector<16x16xf32> to vector<16xf32>
    %64 = vector.shape_cast %63 : vector<16xf32> to vector<16x1xf32>
    %65 = vector.broadcast %64 : vector<16x1xf32> to vector<16x16xf32>
    %66 = arith.subf %62, %65 : vector<16x16xf32>
    %67 = math.exp %66 : vector<16x16xf32>
    %68 = arith.mulf %67, %1 : vector<16x16xf32>
    %cst_25 = arith.constant dense<0.000000e+00> : vector<16xf32>
    %69 = vector.multi_reduction <add>, %68, %cst_25 [1] : vector<16x16xf32> to vector<16xf32>
    %70 = vector.shape_cast %69 : vector<16xf32> to vector<16x1xf32>
    %71 = arith.truncf %68 : vector<16x16xf32> to vector<16x16xbf16>
    %72 = arith.truncf %48 : vector<16x32xf32> to vector<16x32xbf16>
    %cst_26 = arith.constant dense<0.000000e+00> : vector<16x32xf32>
    %73 = tpu.matmul %71, %72, %cst_26 {dimension_numbers = #tpu.dot_dimension_numbers<[1], [0], [0], [1], [0, 0, 1, 1], [], []>} : vector<16x16xbf16>, vector<16x32xbf16>, vector<16x32xf32> -> vector<16x32xf32>
    %cst_27 = arith.constant 1.000000e-30 : f32
    %74 = vector.broadcast %cst_27 : f32 to vector<16x1xf32>
    %75 = arith.maximumf %70, %74 : vector<16x1xf32>
    %76 = tpu.reciprocal %75 {approx = true} : vector<16x1xf32> -> vector<16x1xf32>
    %77 = vector.broadcast %76 : vector<16x1xf32> to vector<16x32xf32>
    %78 = arith.mulf %73, %77 : vector<16x32xf32>
    %79 = arith.addf %78, %51 : vector<16x32xf32>
    %80 = vector.broadcast %45 : vector<1x32xf32> to vector<16x32xf32>
    %81 = arith.addf %79, %80 : vector<16x32xf32>
    %82 = vector.shape_cast %81 : vector<16x32xf32> to vector<1x16x32xf32>
    %cst_28 = arith.constant dense<0.000000e+00> : vector<1xf32>
    %83 = vector.multi_reduction <add>, %82, %cst_28 [1, 2] : vector<1x16x32xf32> to vector<1xf32>
    %84 = vector.shape_cast %83 : vector<1xf32> to vector<1x1x1xf32>
    %85 = vector.extract %84[0, 0, 0] : f32 from vector<1x1x1xf32>
    %86 = arith.mulf %81, %81 : vector<16x32xf32>
    %87 = vector.shape_cast %86 : vector<16x32xf32> to vector<1x16x32xf32>
    %cst_29 = arith.constant dense<0.000000e+00> : vector<1xf32>
    %88 = vector.multi_reduction <add>, %87, %cst_29 [1, 2] : vector<1x16x32xf32> to vector<1xf32>
    %89 = vector.shape_cast %88 : vector<1xf32> to vector<1x1x1xf32>
    %90 = vector.extract %89[0, 0, 0] : f32 from vector<1x1x1xf32>
    %cst_30 = arith.constant 0.001953125 : f32
    %91 = arith.mulf %85, %cst_30 : f32
    %cst_31 = arith.constant 0.001953125 : f32
    %92 = arith.mulf %90, %cst_31 : f32
    %93 = arith.mulf %91, %91 : f32
    %94 = arith.subf %92, %93 : f32
    %cst_32 = arith.constant 0.000000e+00 : f32
    %95 = arith.maximumf %94, %cst_32 : f32
    %96 = vector.broadcast %91 : f32 to vector<16x32xf32>
    %97 = arith.subf %81, %96 : vector<16x32xf32>
    %98 = math.sqrt %95 : f32
    %cst_33 = arith.constant 9.99999974E-6 : f32
    %99 = arith.addf %98, %cst_33 : f32
    %100 = vector.broadcast %99 : f32 to vector<16x32xf32>
    %101 = arith.divf %97, %100 : vector<16x32xf32>
    %c0_34 = arith.constant 0 : index
    %c0_35 = arith.constant 0 : index
    %102 = vector.load %arg6[%c0_34, %c0_35] : memref<32x1xf32, #tpu.memory_space<vmem>>, vector<32x1xf32>
    %cst_36 = arith.constant dense<0.000000e+00> : vector<16x1xf32>
    %103 = tpu.matmul %101, %102, %cst_36 {dimension_numbers = #tpu.dot_dimension_numbers<[1], [0], [0], [1], [0, 0, 1, 1], [], []>} : vector<16x32xf32>, vector<32x1xf32>, vector<16x1xf32> -> vector<16x1xf32>
    %c0_37 = arith.constant 0 : index
    %c0_38 = arith.constant 0 : index
    %104 = vector.load %arg7[%c0_37, %c0_38] : memref<1x1xf32, #tpu.memory_space<vmem>>, vector<1x1xf32>
    %105 = vector.broadcast %104 : vector<1x1xf32> to vector<16x1xf32>
    %106 = arith.addf %103, %105 : vector<16x1xf32>
    %c0_39 = arith.constant 0 : index
    %c0_40 = arith.constant 0 : index
    %107 = vector.load %arg8[%c0_39, %c0_40] : memref<16x1xf32, #tpu.memory_space<vmem>>, vector<16x1xf32>
    tpu.vector_store %arg8[%c0_39, %c0_40], %106 {strides = array<i32>} : memref<16x1xf32, #tpu.memory_space<vmem>>, vector<16x1xf32>,
    return
  }
}

</mosaic_0001>

<llo_original>
// kernel: gnn_forward.1
$region0: #{gnn_forward.1}
  #allocation0 [shape = 'u32[]', space=smem, size = 0x4, offset = 0x4, fixed_abs, tag = 'smem constant byte address 0x4 - core index']
  #allocation1 [shape = 'u32[144,128]{1,0:T(1,128)}', space=vmem, size = 0x12000, scoped, tag = 'internal scratch']
  #allocation2 [shape = 'f32[1,1]{1,0:T(1,128)S(1)}', space=vmem, size = 0x200, scoped, tag = 'scoped memory for gnn_forward.1']
  %s0 = inlined_call_operand.vmem [shape: f32[16,8], index: 0, kind: input, shape index: {}]
  %s1 = inlined_call_operand.vmem [shape: f32[16,16], index: 1, kind: input, shape index: {}]
  %s2 = inlined_call_operand.vmem [shape: bf16[8,66], index: 2, kind: input, shape index: {}]
  %s3 = inlined_call_operand.vmem [shape: f32[1,32], index: 3, kind: input, shape index: {}]
  %s4 = inlined_call_operand.vmem [shape: bf16[32,66], index: 4, kind: input, shape index: {}]
  %s5 = inlined_call_operand.vmem [shape: f32[1,32], index: 5, kind: input, shape index: {}]
  %s6 = inlined_call_operand.vmem [shape: f32[32,1], index: 6, kind: input, shape index: {}]
  %s7 = inlined_call_operand.<no memory space> [shape: f32[1,1], index: 7, kind: input, shape index: {}]
  %s8 = inlined_call_operand.vmem [shape: f32[16,1], index: 8, kind: output, shape index: {}]
  %s9 = sld [smem:[#allocation0]]
  $region42: #{gnn_forward.1} parent=0
    _
  %s11 = ssub.s32 1, %s9
  %s12 = scalar_select 0, %s11, %s9
  %v13 = vstv %s7
  %14 = vst [vmem:[#allocation2] sm:$0x1] %v13
  // Predicated region
  $region2: #{gnn_forward.1} parent=0 // pred_check
    _
  $region3: #{gnn_forward.1} parent=0 // pred_check_branch
    %16 = sbr.rel (0) target = $region5
  $region4: #{gnn_forward.1} parent=0 // pred_region
    _
  $region5: #{gnn_forward.1} parent=0 // pred_fallthru
    _
  // Predicated region
  $region6: #{gnn_forward.1} parent=0 // pred_check
    _
  $region7: #{gnn_forward.1} parent=0 // pred_check_branch
    %18 = sbr.rel (0) target = $region9
  $region8: #{gnn_forward.1} parent=0 // pred_region
    _
  $region9: #{gnn_forward.1} parent=0 // pred_fallthru
    _
  // Predicated region
  $region10: #{gnn_forward.1} parent=0 // pred_check
    _
  $region11: #{gnn_forward.1} parent=0 // pred_check_branch
    %20 = sbr.rel (0) target = $region13
  $region12: #{gnn_forward.1} parent=0 // pred_region
    _
  $region13: #{gnn_forward.1} parent=0 // pred_fallthru
    _
  // Predicated region
  $region14: #{gnn_forward.1} parent=0 // pred_check
    _
  $region15: #{gnn_forward.1} parent=0 // pred_check_branch
    %22 = sbr.rel (0) target = $region17
  $region16: #{gnn_forward.1} parent=0 // pred_region
    _
  $region17: #{gnn_forward.1} parent=0 // pred_fallthru
    _
  // Predicated region
  $region18: #{gnn_forward.1} parent=0 // pred_check
    _
  $region19: #{gnn_forward.1} parent=0 // pred_check_branch
    %24 = sbr.rel (0) target = $region21
  $region20: #{gnn_forward.1} parent=0 // pred_region
    _
  $region21: #{gnn_forward.1} parent=0 // pred_fallthru
    _
  // Predicated region
  $region22: #{gnn_forward.1} parent=0 // pred_check
    _
  $region23: #{gnn_forward.1} parent=0 // pred_check_branch
    %26 = sbr.rel (0) target = $region25
  $region24: #{gnn_forward.1} parent=0 // pred_region
    _
  $region25: #{gnn_forward.1} parent=0 // pred_fallthru
    _
  // Predicated region
  $region26: #{gnn_forward.1} parent=0 // pred_check
    _
  $region27: #{gnn_forward.1} parent=0 // pred_check_branch
    %28 = sbr.rel (0) target = $region29
  $region28: #{gnn_forward.1} parent=0 // pred_region
    _
  $region29: #{gnn_forward.1} parent=0 // pred_fallthru
    _
  // Predicated region
  $region30: #{gnn_forward.1} parent=0 // pred_check
    _
  $region31: #{gnn_forward.1} parent=0 // pred_check_branch
    %30 = sbr.rel (0) target = $region33
  $region32: #{gnn_forward.1} parent=0 // pred_region
    _
  $region33: #{gnn_forward.1} parent=0 // pred_fallthru
    _
  %v32 = vld [vmem:[%s0] sm:$0xff]
  %v33 = vld [vmem:[%s0 + $0x8] sm:$0xff]
  %v34 = vld [vmem:[%s1] sm:$0xff]
  %v35 = vld [vmem:[%s1 + $0x8] sm:$0xff]
  %vm36 = vcmp.gt.f32.partialorder %v34, 0.0
  %vm37 = vcmp.gt.f32.partialorder %v35, 0.0
  %v38 = vld [vmem:[%s2] sm:$0xf]
  %v39 = vld [vmem:[%s3] sm:$0x1]
  %v40 = vpack.c.bf16 %v33, %v32
  %vm41 = vcmask 64512
  %v43 = vsel %vm41, %v40, 0
  %vm45 = vcmask 1043456
  %v47 = vsel %vm45, %v38, 0
  %49 = vmatprep.subr.bf16.mxu0 0
  %50 = vmatpush1.bf16.msra.mxu0 0
  %51 = vmatprep.subr.bf16.mxu0 0
  %52 = vmatpush1.bf16.msra.mxu0 0
  %53 = vmatprep.subr.bf16.mxu0 0
  %54 = vmatpush1.bf16.msra.mxu0 0
  %55 = vmatprep.subr.bf16.mxu0 0
  %56 = vmatpush1.bf16.msra.mxu0 0
  %57 = vmatprep.subr.bf16.mxu0 0
  %58 = vmatpush1.bf16.msra.mxu0 0
  %59 = vmatprep.subr.bf16.mxu0 0
  %60 = vmatpush1.bf16.msra.mxu0 0
  %61 = vmatprep.subr.bf16.mxu0 0
  %62 = vmatpush1.bf16.msra.mxu0 0
  %63 = vmatprep.subr.bf16.mxu0 0
  %64 = vmatpush1.bf16.msra.mxu0 %v47
  %65 = vmatprep.subr.bf16.mxu0 0
  %66 = vmatpush2.bf16.msra.mxu0 0
  %67 = vmatprep.subr.bf16.mxu0 0
  %68 = vmatpush2.bf16.msra.mxu0 0
  %69 = vmatprep.subr.bf16.mxu0 0
  %70 = vmatpush2.bf16.msra.mxu0 0
  %71 = vmatprep.subr.bf16.mxu0 0
  %72 = vmatpush2.bf16.msra.mxu0 0
  %73 = vmatprep.subr.bf16.mxu0 0
  %74 = vmatpush2.bf16.msra.mxu0 0
  %75 = vmatprep.subr.bf16.mxu0 0
  %76 = vmatpush2.bf16.msra.mxu0 0
  %77 = vmatprep.subr.bf16.mxu0 0
  %78 = vmatpush2.bf16.msra.mxu0 0
  %79 = vmatprep.subr.bf16.mxu0 0
  %80 = vmatpush2.bf16.msra.mxu0 0
  %81 = vmatprep.mubr.bf16.mxu0 0
  %82 = vmatmul.mubr.bf16.gmra.mxu0 %v43
  %v83 = vpop.f32.mrf.mxu0
  %v84 = vadd.f32 0.0, %v83
  %v85 = vpop.f32.mrf.mxu0
  %v86 = vpop.f32.mrf.mxu0
  %v87 = vadd.f32 0.0, %v86
  %v88 = vpop.f32.mrf.mxu0
  %89 = vdwg.mxu0
  %92 = vrot.lane.b32.xlu0 %v84, 96
  %v93 = vpop.permute.xlu0 %92
  %94 = vrot.lane.b32.xlu0 %v87, 96
  %v95 = vpop.permute.xlu0 %94
  %98 = vxpose.xlu0.b32.start [1/16] %v93, 128
  %99 = vxpose.xlu0.b32.cont [2/16] %v95, 128
  %100 = vxpose.xlu0.b32.cont [3/16] 0.0, 128
  %101 = vxpose.xlu0.b32.cont [4/16] 0.0, 128
  %102 = vxpose.xlu0.b32.cont [5/16] 0.0, 128
  %103 = vxpose.xlu0.b32.cont [6/16] 0.0, 128
  %104 = vxpose.xlu0.b32.cont [7/16] 0.0, 128
  %105 = vxpose.xlu0.b32.cont [8/16] 0.0, 128
  %106 = vxpose.xlu0.b32.cont [9/16] 0.0, 128
  %107 = vxpose.xlu0.b32.cont [10/16] 0.0, 128
  %108 = vxpose.xlu0.b32.cont [11/16] 0.0, 128
  %109 = vxpose.xlu0.b32.cont [12/16] 0.0, 128
  %110 = vxpose.xlu0.b32.cont [13/16] 0.0, 128
  %111 = vxpose.xlu0.b32.cont [14/16] 0.0, 128
  %112 = vxpose.xlu0.b32.cont [15/16] 0.0, 128
  %113 = vxpose.xlu0.b32.end [16/16] 0.0, 128
  %v114 = vpop.trf.xlu0
  %v115 = vpop.trf.xlu0
  %v116 = vpop.trf.xlu0
  %v117 = vpop.trf.xlu0
  %v118 = vpop.trf.xlu0
  %v119 = vpop.trf.xlu0
  %v120 = vpop.trf.xlu0
  %v121 = vpop.trf.xlu0
  %v122 = vpop.trf.xlu0
  %v123 = vpop.trf.xlu0
  %v124 = vpop.trf.xlu0
  %v125 = vpop.trf.xlu0
  %v126 = vpop.trf.xlu0
  %v127 = vpop.trf.xlu0
  %v128 = vpop.trf.xlu0
  %v129 = vpop.trf.xlu0
  %130 = vset.pattern.permute.xlu0 33
  %131 = vperm.xlu0 %130, %v84
  %v132 = vpop.permute.xlu0 %131
  %134 = vset.pattern.permute.xlu0 33
  %135 = vperm.xlu0 %134, %v87
  %v136 = vpop.permute.xlu0 %135
  %v138 = vlaneseq
  %v139 = vshrl.u32 %v138, 7
  %v140 = vsub.s32 0, %v139
  %v141 = vrot.slane %v114, %v140
  %v142 = vadd.f32 %v132, %v141
  %v143 = vadd.f32 %v136, %v141
  %vm144 = vcmp.gt.f32.partialorder %v142, 0.0
  %vm145 = vcmp.gt.f32.partialorder %v143, 0.0
  %v146 = vmul.f32 %v142, 0.2
  %v147 = vmul.f32 %v143, 0.2
  %v148 = vsel %vm144, %v142, %v146
  %v149 = vsel %vm145, %v143, %v147
  %v150 = vsel %vm36, %v148, -1e+30
  %v151 = vsel %vm37, %v149, -1e+30
  %vm152 = vcmask 130048
  %v153 = vsel %vm152, %v150, -inf
  %154 = vmax.xlane.f32.xlu0 %v153
  %v155 = vpop.xlane.xlu0 %154
  %v156 = vsel %vm152, %v151, -inf
  %157 = vmax.xlane.f32.xlu0 %v156
  %v158 = vpop.xlane.xlu0 %157
  %v159 = vsub.f32 %v150, %v155
  %v160 = vsub.f32 %v151, %v158
  %v161 = vmul.f32 %v159, 1.442695
  %v162 = vpow.pop %v161
  %v163 = vmul.f32 %v160, 1.442695
  %v164 = vpow.pop %v163
  %v165 = vmul.f32 %v162, %v34
  %v166 = vmul.f32 %v164, %v35
  %v167 = vsel %vm152, %v165, 0.0
  %168 = vadd.xlane.f32.xlu0 %v167
  %v169 = vpop.xlane.xlu0 %168
  %v170 = vsel %vm152, %v166, 0.0
  %171 = vadd.xlane.f32.xlu0 %v170
  %v172 = vpop.xlane.xlu0 %171
  %v173 = vpack.c.bf16 %v166, %v165
  %v174 = vpack.c.bf16 %v87, %v84
  %v176 = vsel %vm152, %v173, 0
  %178 = vmatprep.subr.bf16.mxu0 0
  %179 = vmatpush1.bf16.msra.mxu0 0
  %180 = vmatprep.subr.bf16.mxu0 0
  %181 = vmatpush1.bf16.msra.mxu0 0
  %182 = vmatprep.subr.bf16.mxu0 0
  %183 = vmatpush1.bf16.msra.mxu0 0
  %184 = vmatprep.subr.bf16.mxu0 0
  %185 = vmatpush1.bf16.msra.mxu0 0
  %186 = vmatprep.subr.bf16.mxu0 0
  %187 = vmatpush1.bf16.msra.mxu0 0
  %188 = vmatprep.subr.bf16.mxu0 0
  %189 = vmatpush1.bf16.msra.mxu0 0
  %190 = vmatprep.subr.bf16.mxu0 0
  %191 = vmatpush1.bf16.msra.mxu0 0
  %192 = vmatprep.subr.bf16.mxu0 0
  %193 = vmatpush1.bf16.msra.mxu0 %v174
  %194 = vmatprep.subr.bf16.mxu0 0
  %195 = vmatpush2.bf16.msra.mxu0 0
  %196 = vmatprep.subr.bf16.mxu0 0
  %197 = vmatpush2.bf16.msra.mxu0 0
  %198 = vmatprep.subr.bf16.mxu0 0
  %199 = vmatpush2.bf16.msra.mxu0 0
  %200 = vmatprep.subr.bf16.mxu0 0
  %201 = vmatpush2.bf16.msra.mxu0 0
  %202 = vmatprep.subr.bf16.mxu0 0
  %203 = vmatpush2.bf16.msra.mxu0 0
  %204 = vmatprep.subr.bf16.mxu0 0
  %205 = vmatpush2.bf16.msra.mxu0 0
  %206 = vmatprep.subr.bf16.mxu0 0
  %207 = vmatpush2.bf16.msra.mxu0 0
  %208 = vmatprep.subr.bf16.mxu0 0
  %209 = vmatpush2.bf16.msra.mxu0 0
  %210 = vmatprep.mubr.bf16.mxu0 0
  %211 = vmatmul.mubr.bf16.gmra.mxu0 %v176
  %v212 = vpop.f32.mrf.mxu0
  %v213 = vadd.f32 0.0, %v212
  %v214 = vpop.f32.mrf.mxu0
  %v215 = vpop.f32.mrf.mxu0
  %v216 = vadd.f32 0.0, %v215
  %v217 = vpop.f32.mrf.mxu0
  %218 = vdwg.mxu0
  %v219 = vmax.f32 %v169, 1e-30
  %v220 = vmax.f32 %v172, 1e-30
  %v221 = vrcp.pop %v219
  %v222 = vrcp.pop %v220
  %v223 = vmul.f32 %v213, %v221
  %v224 = vmul.f32 %v216, %v222
  %225 = vrot.lane.b32.xlu0 %v84, 94
  %v226 = vpop.permute.xlu0 %225
  %227 = vrot.lane.b32.xlu0 %v87, 94
  %v228 = vpop.permute.xlu0 %227
  %v231 = vadd.f32 %v223, %v226
  %v232 = vadd.f32 %v224, %v228
  %v234 = vlaneseq
  %v235 = vshrl.u32 %v234, 7
  %v236 = vsub.s32 0, %v235
  %v237 = vrot.slane %v39, %v236
  %v239 = vadd.f32 %v231, %v237
  %v240 = vadd.f32 %v232, %v237
  %v241 = vmax.f32 %v239, 0.0
  %v242 = vmax.f32 %v240, 0.0
  %v243 = vld [vmem:[%s4] sm:$0xf]
  %v244 = vld [vmem:[%s4 + $0x4] sm:$0xf]
  %v245 = vld [vmem:[%s4 + $0x8] sm:$0xf]
  %v246 = vld [vmem:[%s4 + $0xc] sm:$0xf]
  %v247 = vld [vmem:[%s5] sm:$0x1]
  %v248 = vpack.c.bf16 %v242, %v241
  %v253 = vunpack.c.l.b16 %v243
  %v254 = vunpack.c.l.b16 %v244
  %v255 = vunpack.c.l.b16 %v245
  %v256 = vunpack.c.l.b16 %v246
  %v257 = vpack.c.b16 %v254, %v253
  %v258 = vpack.c.b16 %v256, %v255
  %vm261 = vcmask 261120
  %v263 = vsel %vm261, %v248, 0
  %265 = vmatprep.subr.bf16.mxu0 0
  %266 = vmatpush1.bf16.msra.mxu0 0
  %267 = vmatprep.subr.bf16.mxu0 0
  %268 = vmatpush1.bf16.msra.mxu0 0
  %269 = vmatprep.subr.bf16.mxu0 0
  %270 = vmatpush1.bf16.msra.mxu0 0
  %271 = vmatprep.subr.bf16.mxu0 0
  %272 = vmatpush1.bf16.msra.mxu0 0
  %273 = vmatprep.subr.bf16.mxu0 0
  %274 = vmatpush1.bf16.msra.mxu0 0
  %275 = vmatprep.subr.bf16.mxu0 0
  %276 = vmatpush1.bf16.msra.mxu0 0
  %277 = vmatprep.subr.bf16.mxu0 0
  %278 = vmatpush1.bf16.msra.mxu0 %v258
  %279 = vmatprep.subr.bf16.mxu0 0
  %280 = vmatpush1.bf16.msra.mxu0 %v257
  %281 = vmatprep.subr.bf16.mxu0 0
  %282 = vmatpush2.bf16.msra.mxu0 0
  %283 = vmatprep.subr.bf16.mxu0 0
  %284 = vmatpush2.bf16.msra.mxu0 0
  %285 = vmatprep.subr.bf16.mxu0 0
  %286 = vmatpush2.bf16.msra.mxu0 0
  %287 = vmatprep.subr.bf16.mxu0 0
  %288 = vmatpush2.bf16.msra.mxu0 0
  %289 = vmatprep.subr.bf16.mxu0 0
  %290 = vmatpush2.bf16.msra.mxu0 0
  %291 = vmatprep.subr.bf16.mxu0 0
  %292 = vmatpush2.bf16.msra.mxu0 0
  %293 = vmatprep.subr.bf16.mxu0 0
  %294 = vmatpush2.bf16.msra.mxu0 0
  %295 = vmatprep.subr.bf16.mxu0 0
  %296 = vmatpush2.bf16.msra.mxu0 0
  %297 = vmatprep.mubr.bf16.mxu0 0
  %298 = vmatmul.mubr.bf16.gmra.mxu0 %v263
  %v299 = vpop.f32.mrf.mxu0
  %v300 = vadd.f32 0.0, %v299
  %v301 = vpop.f32.mrf.mxu0
  %v302 = vpop.f32.mrf.mxu0
  %v303 = vadd.f32 0.0, %v302
  %v304 = vpop.f32.mrf.mxu0
  %305 = vdwg.mxu0
  %308 = vrot.lane.b32.xlu0 %v300, 96
  %v309 = vpop.permute.xlu0 %308
  %310 = vrot.lane.b32.xlu0 %v303, 96
  %v311 = vpop.permute.xlu0 %310
  %314 = vxpose.xlu0.b32.start [1/16] %v309, 128
  %315 = vxpose.xlu0.b32.cont [2/16] %v311, 128
  %316 = vxpose.xlu0.b32.cont [3/16] 0.0, 128
  %317 = vxpose.xlu0.b32.cont [4/16] 0.0, 128
  %318 = vxpose.xlu0.b32.cont [5/16] 0.0, 128
  %319 = vxpose.xlu0.b32.cont [6/16] 0.0, 128
  %320 = vxpose.xlu0.b32.cont [7/16] 0.0, 128
  %321 = vxpose.xlu0.b32.cont [8/16] 0.0, 128
  %322 = vxpose.xlu0.b32.cont [9/16] 0.0, 128
  %323 = vxpose.xlu0.b32.cont [10/16] 0.0, 128
  %324 = vxpose.xlu0.b32.cont [11/16] 0.0, 128
  %325 = vxpose.xlu0.b32.cont [12/16] 0.0, 128
  %326 = vxpose.xlu0.b32.cont [13/16] 0.0, 128
  %327 = vxpose.xlu0.b32.cont [14/16] 0.0, 128
  %328 = vxpose.xlu0.b32.cont [15/16] 0.0, 128
  %329 = vxpose.xlu0.b32.end [16/16] 0.0, 128
  %v330 = vpop.trf.xlu0
  %v331 = vpop.trf.xlu0
  %v332 = vpop.trf.xlu0
  %v333 = vpop.trf.xlu0
  %v334 = vpop.trf.xlu0
  %v335 = vpop.trf.xlu0
  %v336 = vpop.trf.xlu0
  %v337 = vpop.trf.xlu0
  %v338 = vpop.trf.xlu0
  %v339 = vpop.trf.xlu0
  %v340 = vpop.trf.xlu0
  %v341 = vpop.trf.xlu0
  %v342 = vpop.trf.xlu0
  %v343 = vpop.trf.xlu0
  %v344 = vpop.trf.xlu0
  %v345 = vpop.trf.xlu0
  %346 = vset.pattern.permute.xlu0 33
  %347 = vperm.xlu0 %346, %v300
  %v348 = vpop.permute.xlu0 %347
  %350 = vset.pattern.permute.xlu0 33
  %351 = vperm.xlu0 %350, %v303
  %v352 = vpop.permute.xlu0 %351
  %v354 = vlaneseq
  %v355 = vshrl.u32 %v354, 7
  %v356 = vsub.s32 0, %v355
  %v357 = vrot.slane %v330, %v356
  %v358 = vadd.f32 %v348, %v357
  %v359 = vadd.f32 %v352, %v357
  %vm360 = vcmp.gt.f32.partialorder %v358, 0.0
  %vm361 = vcmp.gt.f32.partialorder %v359, 0.0
  %v362 = vmul.f32 %v358, 0.2
  %v363 = vmul.f32 %v359, 0.2
  %v364 = vsel %vm360, %v358, %v362
  %v365 = vsel %vm361, %v359, %v363
  %v366 = vsel %vm36, %v364, -1e+30
  %v367 = vsel %vm37, %v365, -1e+30
  %v368 = vsel %vm152, %v366, -inf
  %369 = vmax.xlane.f32.xlu0 %v368
  %v370 = vpop.xlane.xlu0 %369
  %v371 = vsel %vm152, %v367, -inf
  %372 = vmax.xlane.f32.xlu0 %v371
  %v373 = vpop.xlane.xlu0 %372
  %v374 = vsub.f32 %v366, %v370
  %v375 = vsub.f32 %v367, %v373
  %v376 = vmul.f32 %v374, 1.442695
  %v377 = vpow.pop %v376
  %v378 = vmul.f32 %v375, 1.442695
  %v379 = vpow.pop %v378
  %v380 = vmul.f32 %v377, %v34
  %v381 = vmul.f32 %v379, %v35
  %v382 = vsel %vm152, %v380, 0.0
  %383 = vadd.xlane.f32.xlu0 %v382
  %v384 = vpop.xlane.xlu0 %383
  %v385 = vsel %vm152, %v381, 0.0
  %386 = vadd.xlane.f32.xlu0 %v385
  %v387 = vpop.xlane.xlu0 %386
  %v388 = vpack.c.bf16 %v381, %v380
  %v389 = vpack.c.bf16 %v303, %v300
  %v391 = vsel %vm152, %v388, 0
  %393 = vmatprep.subr.bf16.mxu0 0
  %394 = vmatpush1.bf16.msra.mxu0 0
  %395 = vmatprep.subr.bf16.mxu0 0
  %396 = vmatpush1.bf16.msra.mxu0 0
  %397 = vmatprep.subr.bf16.mxu0 0
  %398 = vmatpush1.bf16.msra.mxu0 0
  %399 = vmatprep.subr.bf16.mxu0 0
  %400 = vmatpush1.bf16.msra.mxu0 0
  %401 = vmatprep.subr.bf16.mxu0 0
  %402 = vmatpush1.bf16.msra.mxu0 0
  %403 = vmatprep.subr.bf16.mxu0 0
  %404 = vmatpush1.bf16.msra.mxu0 0
  %405 = vmatprep.subr.bf16.mxu0 0
  %406 = vmatpush1.bf16.msra.mxu0 0
  %407 = vmatprep.subr.bf16.mxu0 0
  %408 = vmatpush1.bf16.msra.mxu0 %v389
  %409 = vmatprep.subr.bf16.mxu0 0
  %410 = vmatpush2.bf16.msra.mxu0 0
  %411 = vmatprep.subr.bf16.mxu0 0
  %412 = vmatpush2.bf16.msra.mxu0 0
  %413 = vmatprep.subr.bf16.mxu0 0
  %414 = vmatpush2.bf16.msra.mxu0 0
  %415 = vmatprep.subr.bf16.mxu0 0
  %416 = vmatpush2.bf16.msra.mxu0 0
  %417 = vmatprep.subr.bf16.mxu0 0
  %418 = vmatpush2.bf16.msra.mxu0 0
  %419 = vmatprep.subr.bf16.mxu0 0
  %420 = vmatpush2.bf16.msra.mxu0 0
  %421 = vmatprep.subr.bf16.mxu0 0
  %422 = vmatpush2.bf16.msra.mxu0 0
  %423 = vmatprep.subr.bf16.mxu0 0
  %424 = vmatpush2.bf16.msra.mxu0 0
  %425 = vmatprep.mubr.bf16.mxu0 0
  %426 = vmatmul.mubr.bf16.gmra.mxu0 %v391
  %v427 = vpop.f32.mrf.mxu0
  %v428 = vadd.f32 0.0, %v427
  %v429 = vpop.f32.mrf.mxu0
  %v430 = vpop.f32.mrf.mxu0
  %v431 = vadd.f32 0.0, %v430
  %v432 = vpop.f32.mrf.mxu0
  %433 = vdwg.mxu0
  %v434 = vmax.f32 %v384, 1e-30
  %v435 = vmax.f32 %v387, 1e-30
  %v436 = vrcp.pop %v434
  %v437 = vrcp.pop %v435
  %v438 = vmul.f32 %v428, %v436
  %v439 = vmul.f32 %v431, %v437
  %440 = vrot.lane.b32.xlu0 %v300, 94
  %v441 = vpop.permute.xlu0 %440
  %442 = vrot.lane.b32.xlu0 %v303, 94
  %v443 = vpop.permute.xlu0 %442
  %v446 = vadd.f32 %v438, %v441
  %v447 = vadd.f32 %v439, %v443
  %v449 = vlaneseq
  %v450 = vshrl.u32 %v449, 7
  %v451 = vsub.s32 0, %v450
  %v452 = vrot.slane %v247, %v451
  %v454 = vadd.f32 %v446, %v452
  %v455 = vadd.f32 %v447, %v452
  %v456 = vsel %vm261, %v454, 0.0
  %v457 = vsel %vm261, %v455, 0.0
  %v458 = vadd.f32 %v456, %v457
  %459 = vadd.xlane.f32.xlu0 %v458
  %v460 = vpop.xlane.xlu0 %459
  %v461 = vrot.slane %v460, 4
  %v462 = vadd.f32 %v460, %v461
  %v463 = vrot.slane %v462, 2
  %v464 = vadd.f32 %v462, %v463
  %v465 = vrot.slane %v464, 1
  %v466 = vadd.f32 %v464, %v465
  %s467 = vtos %v466
  %v468 = vmul.f32 %v454, %v454
  %v469 = vmul.f32 %v455, %v455
  %v470 = vsel %vm261, %v468, 0.0
  %v471 = vsel %vm261, %v469, 0.0
  %v472 = vadd.f32 %v470, %v471
  %473 = vadd.xlane.f32.xlu0 %v472
  %v474 = vpop.xlane.xlu0 %473
  %v475 = vrot.slane %v474, 4
  %v476 = vadd.f32 %v474, %v475
  %v477 = vrot.slane %v476, 2
  %v478 = vadd.f32 %v476, %v477
  %v479 = vrot.slane %v478, 1
  %v480 = vadd.f32 %v478, %v479
  %s481 = vtos %v480
  %s482 = smul.f32 %s467, 0.001953125
  %s483 = smul.f32 %s481, 0.001953125
  %s484 = smul.f32 %s482, %s482
  %s485 = ssub.f32 %s483, %s484
  %s486 = smax.f32 %s485, 0.0
  %v487 = vstv %s482
  %v488 = vsub.f32 %v454, %v487
  %v489 = vsub.f32 %v455, %v487
  %v490 = vstv %s486
  %v491 = vrsqrt.pop %v490
  %v492 = vmul.f32 %v490, %v491
  %vm493 = vcmp.eq.f32.partialorder %v490, inf
  %v494 = vsel %vm493, %v490, %v492
  %vm495 = vcmp.eq.f32.partialorder %v490, 0.0
  %v496 = vand.u32 %v490, 2147483648
  %v497 = vsel %vm495, %v496, %v494
  %s498 = vtos %v497
  %s499 = sadd.f32 %s498, 1e-05
  %v500 = vstv %s499
  %v501 = vrcp.pop %v500
  %v502 = vmul.f32 %v488, %v501
  %v503 = vmul.f32 %v489, %v501
  %v504 = vld [vmem:[%s6] sm:$0xff]
  %v505 = vld [vmem:[%s6 + $0x8] sm:$0xff]
  %v506 = vld [vmem:[%s6 + $0x10] sm:$0xff]
  %v507 = vld [vmem:[%s6 + $0x18] sm:$0xff]
  %v508 = vld [vmem:[#allocation2] sm:$0x1]
  %v510 = vlaneseq
  %v511 = vshrl.u32 %v510, 7
  %v512 = vsub.s32 0, %v511
  %v513 = vrot.slane %v508, %v512
  %v516 = vsel %vm261, %v502, 0
  %v519 = vsel %vm261, %v503, 0
  %521 = vmatprep.subr.mxu0 0.0
  %522 = vmatpush1.msra.mxu0 0.0
  %523 = vmatprep.subr.mxu0 0.0
  %524 = vmatpush1.msra.mxu0 0.0
  %525 = vmatprep.subr.mxu0 0.0
  %526 = vmatpush1.msra.mxu0 0.0
  %527 = vmatprep.subr.mxu0 0.0
  %528 = vmatpush1.msra.mxu0 0.0
  %529 = vmatprep.subr.mxu0 0.0
  %530 = vmatpush1.msra.mxu0 0.0
  %531 = vmatprep.subr.mxu0 0.0
  %532 = vmatpush1.msra.mxu0 0.0
  %533 = vmatprep.subr.mxu0 0.0
  %534 = vmatpush1.msra.mxu0 0.0
  %535 = vmatprep.subr.mxu0 0.0
  %536 = vmatpush1.msra.mxu0 0.0
  %537 = vmatprep.subr.mxu0 0.0
  %538 = vmatpush1.msra.mxu0 0.0
  %539 = vmatprep.subr.mxu0 0.0
  %540 = vmatpush1.msra.mxu0 0.0
  %541 = vmatprep.subr.mxu0 0.0
  %542 = vmatpush1.msra.mxu0 0.0
  %543 = vmatprep.subr.mxu0 0.0
  %544 = vmatpush1.msra.mxu0 0.0
  %545 = vmatprep.subr.mxu0 0.0
  %546 = vmatpush1.msra.mxu0 %v507
  %547 = vmatprep.subr.mxu0 0.0
  %548 = vmatpush1.msra.mxu0 %v506
  %549 = vmatprep.subr.mxu0 0.0
  %550 = vmatpush1.msra.mxu0 %v505
  %551 = vmatprep.subr.mxu0 0.0
  %552 = vmatpush1.msra.mxu0 %v504
  %553 = vmatprep.subr.mxu0 0.0
  %554 = vmatpush2.msra.mxu0 0.0
  %555 = vmatprep.subr.mxu0 0.0
  %556 = vmatpush2.msra.mxu0 0.0
  %557 = vmatprep.subr.mxu0 0.0
  %558 = vmatpush2.msra.mxu0 0.0
  %559 = vmatprep.subr.mxu0 0.0
  %560 = vmatpush2.msra.mxu0 0.0
  %561 = vmatprep.subr.mxu0 0.0
  %562 = vmatpush2.msra.mxu0 0.0
  %563 = vmatprep.subr.mxu0 0.0
  %564 = vmatpush2.msra.mxu0 0.0
  %565 = vmatprep.subr.mxu0 0.0
  %566 = vmatpush2.msra.mxu0 0.0
  %567 = vmatprep.subr.mxu0 0.0
  %568 = vmatpush2.msra.mxu0 0.0
  %569 = vmatprep.subr.mxu0 0.0
  %570 = vmatpush2.msra.mxu0 0.0
  %571 = vmatprep.subr.mxu0 0.0
  %572 = vmatpush2.msra.mxu0 0.0
  %573 = vmatprep.subr.mxu0 0.0
  %574 = vmatpush2.msra.mxu0 0.0
  %575 = vmatprep.subr.mxu0 0.0
  %576 = vmatpush2.msra.mxu0 0.0
  %577 = vmatprep.subr.mxu0 0.0
  %578 = vmatpush2.msra.mxu0 0.0
  %579 = vmatprep.subr.mxu0 0.0
  %580 = vmatpush2.msra.mxu0 0.0
  %581 = vmatprep.subr.mxu0 0.0
  %582 = vmatpush2.msra.mxu0 0.0
  %583 = vmatprep.subr.mxu0 0.0
  %584 = vmatpush2.msra.mxu0 0.0
  %585 = vmatprep.mubr.f32.mxu0 0.0
  %586 = vmatmul.mubr.f32.gmra.mxu0 %v516
  %v587 = vpop.f32.mrf.mxu0
  %v588 = vadd.f32 %v513, %v587
  %v589 = vpop.f32.mrf.mxu0
  %590 = vmatprep.mubr.f32.mxu0 0.0
  %591 = vmatmul.mubr.f32.gmra.mxu0 %v519
  %v592 = vpop.f32.mrf.mxu0
  %v593 = vadd.f32 %v513, %v592
  %v594 = vpop.f32.mrf.mxu0
  %595 = vdwg.mxu0
  %vm596 = vcmask 7168
  %597 = vst.msk [vmem:[%s8] sm:$0xff] %vm596, %v588
  %598 = vst.msk [vmem:[%s8 + $0x8] sm:$0xff] %vm596, %v593
  // Predicated region
  $region34: #{gnn_forward.1} parent=0 // pred_check
    _
  $region35: #{gnn_forward.1} parent=0 // pred_check_branch
    %600 = sbr.rel (0) target = $region37
  $region36: #{gnn_forward.1} parent=0 // pred_region
    _
  $region37: #{gnn_forward.1} parent=0 // pred_fallthru
    _
  // Predicated region
  $region38: #{gnn_forward.1} parent=0 // pred_check
    _
  $region39: #{gnn_forward.1} parent=0 // pred_check_branch
    %602 = sbr.rel (0) target = $region41
  $region40: #{gnn_forward.1} parent=0 // pred_region
    _
  $region41: #{gnn_forward.1} parent=0 // pred_fallthru
    _

</llo_original>
